<compile_context>
chip_gen: v7x
topology: tpu7x:2x2x1
jax: 0.10.0
libtpu: 0.0.40
codegen_flags: <defaults>
</compile_context>

<pallas_src>
import math
from functools import reduce

import jax
import jax.numpy as jnp
from jax import lax
from jax.experimental import pallas as pl
from jax.experimental.pallas import tpu as pltpu

_BN_EPS = 1e-5            # nn.BatchNorm2d default eps
_INV_SQRT2 = 0.7071067811865476


def _erf_poly(x):
    # Abramowitz & Stegun 7.1.26 rational approximation (max abs err ~1.5e-7):
    # exact-GELU semantics within f32 precision.  Reciprocal goes to the EUP.
    sgn = jnp.where(x >= 0.0, 1.0, -1.0)
    a = jnp.abs(x)
    t = pl.reciprocal(1.0 + 0.3275911 * a, approx=True)
    poly = t * (0.254829592
                + t * (-0.284496736
                       + t * (1.421413741
                              + t * (-1.453152027
                                     + t * 1.061405429))))
    return sgn * (1.0 - poly * jnp.exp(-a * a))


def _feb_forward_impl(x, params):
    B, C, H, W = x.shape
    S = H * W
    BS = B * S
    (w1, b1, wr, br, wi, bi, w2, b2, gamma, beta) = params
    del bi  # exact: the imaginary-mix bias never reaches Re(iFFT)  (1^T Ki = 0)

    # ---- Exact folding of conv1 / FourierUnit / conv2 (see header) ----------
    cs = 0.5 * (w2 @ (wr + wi) @ w1)                 # (C, C)  "even" branch
    cd = 0.5 * (w2 @ (wr - wi) @ w1)                 # (C, C)  "flip" branch
    cb = w2 @ (wr @ b1) + b2                         # (C,)    uniform bias
    dc = math.sqrt(S) * (w2 @ br)                    # (C,)    DC-pixel bias

    wpack = jnp.concatenate([cs, cd], axis=0).astype(jnp.float32)        # (2C, C)
    colpack = jnp.stack([cb, dc, gamma, beta], axis=1).astype(jnp.float32)  # (C, 4)

    # Spatial flip permutation P: (h,w) -> ((-h)%H, (-w)%W).  0/1 matrix, so the
    # bf16 cast is exact and halves the operator DMA bytes.
    fh = (-jnp.arange(H)) % H
    fw = (-jnp.arange(W)) % W
    src = (fh[:, None] * W + fw[None, :]).reshape(S)
    pmat = (src[:, None] == jnp.arange(S)[None, :]).astype(jnp.bfloat16)  # (S, S)

    # Lane-dense slab: rows = channels, cols = (batch, h, w) flattened.
    x_slab = jnp.transpose(x, (1, 0, 2, 3)).reshape(C, BS)

    inv_n = 1.0 / float(BS)          # BatchNorm2d averages over (B, H, W)

    def kernel(x_ref, w_ref, col_ref, p_ref, out_ref):
        xs = x_ref[...]                               # (C, BS) f32
        wp = w_ref[...]                               # (2C, C) f32
        cp = col_ref[...]                             # (C, 4)  f32
        pm = p_ref[...]                               # (S, S)  bf16 (exact 0/1)

        csk = wp[0:C, :]
        cdk = wp[C:2 * C, :]
        cbc = cp[:, 0:1]
        dcc = cp[:, 1:2]
        gmc = cp[:, 2:3]
        btc = cp[:, 3:4]

        # Folded channel mixes: two tiny MXU matmuls (f32 accumulate).
        ts = jnp.dot(csk, xs, preferred_element_type=jnp.float32)   # (C, BS)
        td = jnp.dot(cdk, xs, preferred_element_type=jnp.float32)   # (C, BS)

        # Spatial flip of the difference branch, per image block, sharing the
        # single (S,S) permutation operator.  (For large B: grid over B instead.)
        flip = jnp.concatenate(
            [jnp.dot(td[:, b * S:(b + 1) * S].astype(jnp.bfloat16), pm,
                     preferred_element_type=jnp.float32)
             for b in range(B)], axis=1)                             # (C, BS)

        # Bias terms: uniform cb, plus dc only at the DC pixel of each image.
        col_ids = lax.broadcasted_iota(jnp.int32, (1, BS), 1)
        dc_mask = reduce(jnp.logical_or,
                         [col_ids == b * S for b in range(B)])
        y2 = ts + flip + cbc + dcc * dc_mask.astype(jnp.float32)

        # BatchNorm2d (training-mode batch stats): pure per-row lane reductions,
        # centered two-pass variance, all f32.  Fused with residual + GELU.
        mean = jnp.sum(y2, axis=-1, keepdims=True) * inv_n
        cent = y2 - mean
        var = jnp.sum(cent * cent, axis=-1, keepdims=True) * inv_n
        z = cent * (lax.rsqrt(var + _BN_EPS) * gmc) + btc + xs
        out_ref[...] = 0.5 * z * (1.0 + _erf_poly(z * _INV_SQRT2))

    vmem = pl.BlockSpec(memory_space=pltpu.MemorySpace.VMEM)
    flops = 4 * C * C * BS + 2 * B * C * S * S + 40 * C * BS
    bytes_accessed = 4 * (2 * C * BS + 2 * C * C + 4 * C) + 2 * S * S

    out_slab = pl.pallas_call(
        kernel,
        out_shape=jax.ShapeDtypeStruct((C, BS), jnp.float32),
        in_specs=[vmem] * 4,
        out_specs=vmem,
        cost_estimate=pl.CostEstimate(flops=flops,
                                      transcendentals=2 * C * BS,
                                      bytes_accessed=bytes_accessed),
    )(x_slab, wpack, colpack, pmat)

    return jnp.transpose(out_slab.reshape(C, B, H, W), (1, 0, 2, 3))


# jit the wrapper so the permutation operator and folded weights are traced /
# constant-folded once per shape rather than rebuilt eagerly every call.
feb_forward = jax.jit(_feb_forward_impl)


def init_params(key, C):
    ks = jax.random.split(key, 8)
    bound = 1.0 / math.sqrt(C)

    def u(k, shape):
        return jax.random.uniform(k, shape, jnp.float32, -bound, bound)

    w1, b1 = u(ks[0], (C, C)), u(ks[1], (C,))
    wr, br = u(ks[2], (C, C)), u(ks[3], (C,))
    wi, bi = u(ks[4], (C, C)), u(ks[5], (C,))
    w2, b2 = u(ks[6], (C, C)), u(ks[7], (C,))
    gamma = jnp.ones((C,), jnp.float32)
    beta = jnp.zeros((C,), jnp.float32)
    return (w1, b1, wr, br, wi, bi, w2, b2, gamma, beta)


def feb_reference(x, params):
    """Pure-JAX reference mirroring the PyTorch module (NCHW, real FFT path)."""
    (w1, b1, wr, br, wi, bi, w2, b2, gamma, beta) = params

    def mix(t, w, b):
        return jnp.einsum('oc,bchw->bohw', w, t) + b[None, :, None, None]

    y = mix(x, w1, b1)
    f = jnp.fft.fftn(y.astype(jnp.complex64), axes=(-2, -1), norm='ortho')
    real = mix(jnp.real(f), wr, br)
    imag = mix(jnp.imag(f), wi, bi)
    y = jnp.real(jnp.fft.ifftn(real + 1j * imag, axes=(-2, -1), norm='ortho'))
    y = mix(y, w2, b2)
    mu = jnp.mean(y, axis=(0, 2, 3), keepdims=True)
    var = jnp.mean((y - mu) ** 2, axis=(0, 2, 3), keepdims=True)
    yn = (y - mu) / jnp.sqrt(var + _BN_EPS)
    yn = yn * gamma[None, :, None, None] + beta[None, :, None, None]
    z = yn + x
    return 0.5 * z * (1.0 + jax.scipy.special.erf(z * _INV_SQRT2))


if __name__ == "__main__":
    B, C, H, W = 2, 4, 16, 16
    key = jax.random.PRNGKey(0)
    kx, kp = jax.random.split(key)
    x = jax.random.normal(kx, (B, C, H, W), dtype=jnp.float32)
    params = init_params(kp, C)

    out = feb_forward(x, params)
    out = jax.block_until_ready(out)

    ref = feb_reference(x, params)
    assert out.shape == ref.shape and out.dtype == ref.dtype
    if not bool(jnp.allclose(out, ref, atol=2e-2, rtol=2e-2)):
        raise AssertionError("Pallas FEB kernel does not match JAX reference")
    print("KERNEL_OK")
</pallas_src>

<mosaic_0001>
module attributes {stable_mosaic.version = 11 : i64} {
  func.func @kernel(%arg0: memref<4x512xf32, #tpu.memory_space<vmem>>, %arg1: memref<8x4xf32, #tpu.memory_space<vmem>>, %arg2: memref<4x4xf32, #tpu.memory_space<vmem>>, %arg3: memref<256x256xbf16, #tpu.memory_space<vmem>>, %arg4: memref<4x512xf32, #tpu.memory_space<vmem>>) attributes {dimension_semantics = [], scalar_prefetch = 0 : i64, scratch_operands = 0 : i64, tpu.core_type = #tpu.core_type<tc>} {
    %c0 = arith.constant 0 : index
    %c0_0 = arith.constant 0 : index
    %0 = vector.load %arg0[%c0, %c0_0] : memref<4x512xf32, #tpu.memory_space<vmem>>, vector<4x512xf32>
    %c0_1 = arith.constant 0 : index
    %c0_2 = arith.constant 0 : index
    %1 = vector.load %arg1[%c0_1, %c0_2] : memref<8x4xf32, #tpu.memory_space<vmem>>, vector<8x4xf32>
    %c0_3 = arith.constant 0 : index
    %c0_4 = arith.constant 0 : index
    %2 = vector.load %arg2[%c0_3, %c0_4] : memref<4x4xf32, #tpu.memory_space<vmem>>, vector<4x4xf32>
    %c0_5 = arith.constant 0 : index
    %c0_6 = arith.constant 0 : index
    %3 = vector.load %arg3[%c0_5, %c0_6] : memref<256x256xbf16, #tpu.memory_space<vmem>>, vector<256x256xbf16>
    %4 = vector.extract_strided_slice %1 {offsets = [0, 0], sizes = [4, 4], strides = [1, 1]} : vector<8x4xf32> to vector<4x4xf32>
    %5 = vector.extract_strided_slice %1 {offsets = [4, 0], sizes = [4, 4], strides = [1, 1]} : vector<8x4xf32> to vector<4x4xf32>
    %6 = vector.extract_strided_slice %2 {offsets = [0, 0], sizes = [4, 1], strides = [1, 1]} : vector<4x4xf32> to vector<4x1xf32>
    %7 = vector.extract_strided_slice %2 {offsets = [0, 1], sizes = [4, 1], strides = [1, 1]} : vector<4x4xf32> to vector<4x1xf32>
    %8 = vector.extract_strided_slice %2 {offsets = [0, 2], sizes = [4, 1], strides = [1, 1]} : vector<4x4xf32> to vector<4x1xf32>
    %9 = vector.extract_strided_slice %2 {offsets = [0, 3], sizes = [4, 1], strides = [1, 1]} : vector<4x4xf32> to vector<4x1xf32>
    %cst = arith.constant dense<0.000000e+00> : vector<4x512xf32>
    %10 = tpu.matmul %4, %0, %cst {dimension_numbers = #tpu.dot_dimension_numbers<[1], [0], [0], [1], [0, 0, 1, 1], [], []>} : vector<4x4xf32>, vector<4x512xf32>, vector<4x512xf32> -> vector<4x512xf32>
    %cst_7 = arith.constant dense<0.000000e+00> : vector<4x512xf32>
    %11 = tpu.matmul %5, %0, %cst_7 {dimension_numbers = #tpu.dot_dimension_numbers<[1], [0], [0], [1], [0, 0, 1, 1], [], []>} : vector<4x4xf32>, vector<4x512xf32>, vector<4x512xf32> -> vector<4x512xf32>
    %12 = vector.extract_strided_slice %11 {offsets = [0, 0], sizes = [4, 256], strides = [1, 1]} : vector<4x512xf32> to vector<4x256xf32>
    %13 = arith.truncf %12 : vector<4x256xf32> to vector<4x256xbf16>
    %cst_8 = arith.constant dense<0.000000e+00> : vector<4x256xf32>
    %14 = tpu.matmul %13, %3, %cst_8 {dimension_numbers = #tpu.dot_dimension_numbers<[1], [0], [0], [1], [0, 0, 1, 1], [], []>} : vector<4x256xbf16>, vector<256x256xbf16>, vector<4x256xf32> -> vector<4x256xf32>
    %15 = vector.extract_strided_slice %11 {offsets = [0, 256], sizes = [4, 256], strides = [1, 1]} : vector<4x512xf32> to vector<4x256xf32>
    %16 = arith.truncf %15 : vector<4x256xf32> to vector<4x256xbf16>
    %cst_9 = arith.constant dense<0.000000e+00> : vector<4x256xf32>
    %17 = tpu.matmul %16, %3, %cst_9 {dimension_numbers = #tpu.dot_dimension_numbers<[1], [0], [0], [1], [0, 0, 1, 1], [], []>} : vector<4x256xbf16>, vector<256x256xbf16>, vector<4x256xf32> -> vector<4x256xf32>
    %18 = tpu.concatenate %14, %17 in 1 : vector<4x256xf32>, vector<4x256xf32> -> vector<4x512xf32>
    %19 = tpu.iota {dimensions = array<i32: 1>} : vector<1x512xi32>
    %c0_i32 = arith.constant 0 : i32
    %20 = vector.broadcast %c0_i32 : i32 to vector<1x512xi32>
    %21 = arith.cmpi eq, %19, %20 : vector<1x512xi32>
    %c256_i32 = arith.constant 256 : i32
    %22 = vector.broadcast %c256_i32 : i32 to vector<1x512xi32>
    %23 = arith.cmpi eq, %19, %22 : vector<1x512xi32>
    %24 = arith.ori %21, %23 : vector<1x512xi1>
    %25 = arith.addf %10, %18 : vector<4x512xf32>
    %26 = vector.broadcast %6 : vector<4x1xf32> to vector<4x512xf32>
    %27 = arith.addf %25, %26 : vector<4x512xf32>
    %28 = arith.extui %24 : vector<1x512xi1> to vector<1x512xi32>
    %29 = arith.sitofp %28 : vector<1x512xi32> to vector<1x512xf32>
    %30 = vector.broadcast %7 : vector<4x1xf32> to vector<4x512xf32>
    %31 = vector.broadcast %29 : vector<1x512xf32> to vector<4x512xf32>
    %32 = arith.mulf %30, %31 : vector<4x512xf32>
    %33 = arith.addf %27, %32 : vector<4x512xf32>
    %cst_10 = arith.constant dense<0.000000e+00> : vector<4xf32>
    %34 = vector.multi_reduction <add>, %33, %cst_10 [1] : vector<4x512xf32> to vector<4xf32>
    %35 = vector.shape_cast %34 : vector<4xf32> to vector<4x1xf32>
    %cst_11 = arith.constant 0.001953125 : f32
    %36 = vector.broadcast %cst_11 : f32 to vector<4x1xf32>
    %37 = arith.mulf %35, %36 : vector<4x1xf32>
    %38 = vector.broadcast %37 : vector<4x1xf32> to vector<4x512xf32>
    %39 = arith.subf %33, %38 : vector<4x512xf32>
    %40 = arith.mulf %39, %39 : vector<4x512xf32>
    %cst_12 = arith.constant dense<0.000000e+00> : vector<4xf32>
    %41 = vector.multi_reduction <add>, %40, %cst_12 [1] : vector<4x512xf32> to vector<4xf32>
    %42 = vector.shape_cast %41 : vector<4xf32> to vector<4x1xf32>
    %cst_13 = arith.constant 0.001953125 : f32
    %43 = vector.broadcast %cst_13 : f32 to vector<4x1xf32>
    %44 = arith.mulf %42, %43 : vector<4x1xf32>
    %cst_14 = arith.constant 9.99999974E-6 : f32
    %45 = vector.broadcast %cst_14 : f32 to vector<4x1xf32>
    %46 = arith.addf %44, %45 : vector<4x1xf32>
    %47 = math.rsqrt %46 : vector<4x1xf32>
    %48 = arith.mulf %47, %8 : vector<4x1xf32>
    %49 = vector.broadcast %48 : vector<4x1xf32> to vector<4x512xf32>
    %50 = arith.mulf %39, %49 : vector<4x512xf32>
    %51 = vector.broadcast %9 : vector<4x1xf32> to vector<4x512xf32>
    %52 = arith.addf %50, %51 : vector<4x512xf32>
    %53 = arith.addf %52, %0 : vector<4x512xf32>
    %cst_15 = arith.constant 5.000000e-01 : f32
    %54 = vector.broadcast %cst_15 : f32 to vector<4x512xf32>
    %55 = arith.mulf %54, %53 : vector<4x512xf32>
    %cst_16 = arith.constant 0.707106769 : f32
    %56 = vector.broadcast %cst_16 : f32 to vector<4x512xf32>
    %57 = arith.mulf %53, %56 : vector<4x512xf32>
    %cst_17 = arith.constant 0.000000e+00 : f32
    %58 = vector.broadcast %cst_17 : f32 to vector<4x512xf32>
    %59 = arith.cmpf oge, %57, %58 : vector<4x512xf32>
    %cst_18 = arith.constant 1.000000e+00 : f32
    %cst_19 = arith.constant -1.000000e+00 : f32
    %60 = vector.broadcast %cst_18 : f32 to vector<4x512xf32>
    %61 = vector.broadcast %cst_19 : f32 to vector<4x512xf32>
    %62 = arith.select %59, %60, %61 : vector<4x512xi1>, vector<4x512xf32>
    %63 = math.absf %57 : vector<4x512xf32>
    %cst_20 = arith.constant 0.327591091 : f32
    %64 = vector.broadcast %cst_20 : f32 to vector<4x512xf32>
    %65 = arith.mulf %64, %63 : vector<4x512xf32>
    %cst_21 = arith.constant 1.000000e+00 : f32
    %66 = vector.broadcast %cst_21 : f32 to vector<4x512xf32>
    %67 = arith.addf %66, %65 : vector<4x512xf32>
    %68 = tpu.reciprocal %67 {approx = true} : vector<4x512xf32> -> vector<4x512xf32>
    %cst_22 = arith.constant 1.06140542 : f32
    %69 = vector.broadcast %cst_22 : f32 to vector<4x512xf32>
    %70 = arith.mulf %68, %69 : vector<4x512xf32>
    %cst_23 = arith.constant -1.45315206 : f32
    %71 = vector.broadcast %cst_23 : f32 to vector<4x512xf32>
    %72 = arith.addf %71, %70 : vector<4x512xf32>
    %73 = arith.mulf %68, %72 : vector<4x512xf32>
    %cst_24 = arith.constant 1.42141378 : f32
    %74 = vector.broadcast %cst_24 : f32 to vector<4x512xf32>
    %75 = arith.addf %74, %73 : vector<4x512xf32>
    %76 = arith.mulf %68, %75 : vector<4x512xf32>
    %cst_25 = arith.constant -0.284496725 : f32
    %77 = vector.broadcast %cst_25 : f32 to vector<4x512xf32>
    %78 = arith.addf %77, %76 : vector<4x512xf32>
    %79 = arith.mulf %68, %78 : vector<4x512xf32>
    %cst_26 = arith.constant 0.254829586 : f32
    %80 = vector.broadcast %cst_26 : f32 to vector<4x512xf32>
    %81 = arith.addf %80, %79 : vector<4x512xf32>
    %82 = arith.mulf %68, %81 : vector<4x512xf32>
    %cst_27 = arith.constant 0.000000e+00 : f32
    %83 = vector.broadcast %cst_27 : f32 to vector<4x512xf32>
    %84 = arith.subf %83, %63 : vector<4x512xf32>
    %85 = arith.mulf %84, %63 : vector<4x512xf32>
    %86 = math.exp %85 : vector<4x512xf32>
    %87 = arith.mulf %82, %86 : vector<4x512xf32>
    %cst_28 = arith.constant 1.000000e+00 : f32
    %88 = vector.broadcast %cst_28 : f32 to vector<4x512xf32>
    %89 = arith.subf %88, %87 : vector<4x512xf32>
    %90 = arith.mulf %62, %89 : vector<4x512xf32>
    %cst_29 = arith.constant 1.000000e+00 : f32
    %91 = vector.broadcast %cst_29 : f32 to vector<4x512xf32>
    %92 = arith.addf %91, %90 : vector<4x512xf32>
    %93 = arith.mulf %55, %92 : vector<4x512xf32>
    %c0_30 = arith.constant 0 : index
    %c0_31 = arith.constant 0 : index
    %94 = vector.load %arg4[%c0_30, %c0_31] : memref<4x512xf32, #tpu.memory_space<vmem>>, vector<4x512xf32>
    tpu.vector_store %arg4[%c0_30, %c0_31], %93 {strides = array<i32>} : memref<4x512xf32, #tpu.memory_space<vmem>>, vector<4x512xf32>,
    return
  }
}

</mosaic_0001>

<llo_original>
// kernel: _feb_forward_impl.1
$region0: #{_feb_forward_impl.1}
  #allocation0 [shape = 'u32[]', space=smem, size = 0x4, offset = 0x4, fixed_abs, tag = 'smem constant byte address 0x4 - core index']
  #allocation1 [shape = 'u32[144,128]{1,0:T(1,128)}', space=vmem, size = 0x12000, scoped, tag = 'internal scratch']
  %s0 = inlined_call_operand.vmem [shape: f32[4,512], index: 0, kind: input, shape index: {}]
  %s1 = inlined_call_operand.vmem [shape: f32[8,4], index: 1, kind: input, shape index: {}]
  %s2 = inlined_call_operand.vmem [shape: f32[4,4], index: 2, kind: input, shape index: {}]
  %s3 = inlined_call_operand.vmem [shape: bf16[256,256], index: 3, kind: input, shape index: {}]
  %s4 = inlined_call_operand.vmem [shape: f32[4,512], index: 4, kind: output, shape index: {}]
  %s5 = sld [smem:[#allocation0]]
  $region26: #{_feb_forward_impl.1} parent=0
    _
  %s7 = ssub.s32 1, %s5
  %s8 = scalar_select 0, %s7, %s5
  // Predicated region
  $region2: #{_feb_forward_impl.1} parent=0 // pred_check
    _
  $region3: #{_feb_forward_impl.1} parent=0 // pred_check_branch
    %10 = sbr.rel (0) target = $region5
  $region4: #{_feb_forward_impl.1} parent=0 // pred_region
    _
  $region5: #{_feb_forward_impl.1} parent=0 // pred_fallthru
    _
  // Predicated region
  $region6: #{_feb_forward_impl.1} parent=0 // pred_check
    _
  $region7: #{_feb_forward_impl.1} parent=0 // pred_check_branch
    %12 = sbr.rel (0) target = $region9
  $region8: #{_feb_forward_impl.1} parent=0 // pred_region
    _
  $region9: #{_feb_forward_impl.1} parent=0 // pred_fallthru
    _
  // Predicated region
  $region10: #{_feb_forward_impl.1} parent=0 // pred_check
    _
  $region11: #{_feb_forward_impl.1} parent=0 // pred_check_branch
    %14 = sbr.rel (0) target = $region13
  $region12: #{_feb_forward_impl.1} parent=0 // pred_region
    _
  $region13: #{_feb_forward_impl.1} parent=0 // pred_fallthru
    _
  // Predicated region
  $region14: #{_feb_forward_impl.1} parent=0 // pred_check
    _
  $region15: #{_feb_forward_impl.1} parent=0 // pred_check_branch
    %16 = sbr.rel (0) target = $region17
  $region16: #{_feb_forward_impl.1} parent=0 // pred_region
    _
  $region17: #{_feb_forward_impl.1} parent=0 // pred_fallthru
    _
  %v17 = vld [vmem:[%s0] sm:$0xff]
  %v18 = vld [vmem:[%s0 + $0x8] sm:$0xff]
  %v19 = vld [vmem:[%s1] sm:$0xff]
  %v20 = vld [vmem:[%s2] sm:$0xf]
  %v21 = vld [vmem:[%s3] sm:$0xff]
  %v22 = vld [vmem:[%s3 + $0x8] sm:$0xff]
  %v23 = vld [vmem:[%s3 + $0x10] sm:$0xff]
  %v24 = vld [vmem:[%s3 + $0x18] sm:$0xff]
  %v25 = vld [vmem:[%s3 + $0x20] sm:$0xff]
  %v26 = vld [vmem:[%s3 + $0x28] sm:$0xff]
  %v27 = vld [vmem:[%s3 + $0x30] sm:$0xff]
  %v28 = vld [vmem:[%s3 + $0x38] sm:$0xff]
  %v29 = vld [vmem:[%s3 + $0x40] sm:$0xff]
  %v30 = vld [vmem:[%s3 + $0x48] sm:$0xff]
  %v31 = vld [vmem:[%s3 + $0x50] sm:$0xff]
  %v32 = vld [vmem:[%s3 + $0x58] sm:$0xff]
  %v33 = vld [vmem:[%s3 + $0x60] sm:$0xff]
  %v34 = vld [vmem:[%s3 + $0x68] sm:$0xff]
  %v35 = vld [vmem:[%s3 + $0x70] sm:$0xff]
  %v36 = vld [vmem:[%s3 + $0x78] sm:$0xff]
  %v37 = vld [vmem:[%s3 + $0x80] sm:$0xff]
  %v38 = vld [vmem:[%s3 + $0x88] sm:$0xff]
  %v39 = vld [vmem:[%s3 + $0x90] sm:$0xff]
  %v40 = vld [vmem:[%s3 + $0x98] sm:$0xff]
  %v41 = vld [vmem:[%s3 + $0xa0] sm:$0xff]
  %v42 = vld [vmem:[%s3 + $0xa8] sm:$0xff]
  %v43 = vld [vmem:[%s3 + $0xb0] sm:$0xff]
  %v44 = vld [vmem:[%s3 + $0xb8] sm:$0xff]
  %v45 = vld [vmem:[%s3 + $0xc0] sm:$0xff]
  %v46 = vld [vmem:[%s3 + $0xc8] sm:$0xff]
  %v47 = vld [vmem:[%s3 + $0xd0] sm:$0xff]
  %v48 = vld [vmem:[%s3 + $0xd8] sm:$0xff]
  %v49 = vld [vmem:[%s3 + $0xe0] sm:$0xff]
  %v50 = vld [vmem:[%s3 + $0xe8] sm:$0xff]
  %v51 = vld [vmem:[%s3 + $0xf0] sm:$0xff]
  %v52 = vld [vmem:[%s3 + $0xf8] sm:$0xff]
  %v54 = vrot.slane %v19, 4
  %v57 = vcombine.high %v17, %v17
  %v58 = vcombine.high %v18, %v18
  %vm59 = vcmask 31744
  %v60 = vsel %vm59, %v54, 0
  %vm62 = vcmask 1043456
  %v63 = vsel %vm62, %v17, 0
  %v65 = vsel %vm62, %v57, 0
  %v67 = vsel %vm62, %v18, 0
  %v69 = vsel %vm62, %v58, 0
  %71 = vmatprep.subr.mxu0 %v65
  %72 = vmatpush1.msra.mxu0 %v63
  %73 = vmatprep.subr.mxu0 0.0
  %74 = vmatpush1.msra.mxu0 0.0
  %75 = vmatprep.subr.mxu0 0.0
  %76 = vmatpush1.msra.mxu0 0.0
  %77 = vmatprep.subr.mxu0 0.0
  %78 = vmatpush1.msra.mxu0 0.0
  %79 = vmatprep.subr.mxu0 0.0
  %80 = vmatpush1.msra.mxu0 0.0
  %81 = vmatprep.subr.mxu0 0.0
  %82 = vmatpush1.msra.mxu0 0.0
  %83 = vmatprep.subr.mxu0 0.0
  %84 = vmatpush1.msra.mxu0 0.0
  %85 = vmatprep.subr.mxu0 0.0
  %86 = vmatpush1.msra.mxu0 0.0
  %87 = vmatprep.subr.mxu0 0.0
  %88 = vmatpush1.msra.mxu0 0.0
  %89 = vmatprep.subr.mxu0 0.0
  %90 = vmatpush1.msra.mxu0 0.0
  %91 = vmatprep.subr.mxu0 0.0
  %92 = vmatpush1.msra.mxu0 0.0
  %93 = vmatprep.subr.mxu0 0.0
  %94 = vmatpush1.msra.mxu0 0.0
  %95 = vmatprep.subr.mxu0 0.0
  %96 = vmatpush1.msra.mxu0 0.0
  %97 = vmatprep.subr.mxu0 0.0
  %98 = vmatpush1.msra.mxu0 0.0
  %99 = vmatprep.subr.mxu0 0.0
  %100 = vmatpush1.msra.mxu0 0.0
  %101 = vmatprep.subr.mxu0 0.0
  %102 = vmatpush1.msra.mxu0 0.0
  %103 = vmatprep.subr.mxu0 0.0
  %104 = vmatpush1.msra.mxu0 0.0
  %105 = vmatprep.subr.mxu0 0.0
  %106 = vmatpush1.msra.mxu0 0.0
  %107 = vmatprep.subr.mxu0 0.0
  %108 = vmatpush1.msra.mxu0 0.0
  %109 = vmatprep.subr.mxu0 0.0
  %110 = vmatpush1.msra.mxu0 0.0
  %111 = vmatprep.subr.mxu0 0.0
  %112 = vmatpush1.msra.mxu0 0.0
  %113 = vmatprep.subr.mxu0 0.0
  %114 = vmatpush1.msra.mxu0 0.0
  %115 = vmatprep.subr.mxu0 0.0
  %116 = vmatpush1.msra.mxu0 0.0
  %117 = vmatprep.subr.mxu0 0.0
  %118 = vmatpush1.msra.mxu0 0.0
  %119 = vmatprep.subr.mxu0 0.0
  %120 = vmatpush1.msra.mxu0 0.0
  %121 = vmatprep.subr.mxu0 0.0
  %122 = vmatpush1.msra.mxu0 0.0
  %123 = vmatprep.subr.mxu0 0.0
  %124 = vmatpush1.msra.mxu0 0.0
  %125 = vmatprep.subr.mxu0 0.0
  %126 = vmatpush1.msra.mxu0 0.0
  %127 = vmatprep.subr.mxu0 0.0
  %128 = vmatpush1.msra.mxu0 0.0
  %129 = vmatprep.subr.mxu0 0.0
  %130 = vmatpush1.msra.mxu0 0.0
  %131 = vmatprep.subr.mxu0 0.0
  %132 = vmatpush1.msra.mxu0 0.0
  %133 = vmatprep.subr.mxu0 0.0
  %134 = vmatpush1.msra.mxu0 0.0
  %135 = vmatprep.mubr.f32.mxu0 0.0
  %136 = vmatmul.mubr.f32.gmra.mrb[0].mxu0 %v60
  %v137 = vpop.f32.mrb[0].mxu0
  %v138 = vadd.f32 0.0, %v137
  %v139 = vpop.f32.mrb[0].mxu0
  %v140 = vadd.f32 0.0, %v139
  %141 = vdwg.mxu0
  %142 = vmatprep.subr.mxu0 %v69
  %143 = vmatpush1.msra.mxu0 %v67
  %144 = vmatprep.subr.mxu0 0.0
  %145 = vmatpush1.msra.mxu0 0.0
  %146 = vmatprep.subr.mxu0 0.0
  %147 = vmatpush1.msra.mxu0 0.0
  %148 = vmatprep.subr.mxu0 0.0
  %149 = vmatpush1.msra.mxu0 0.0
  %150 = vmatprep.subr.mxu0 0.0
  %151 = vmatpush1.msra.mxu0 0.0
  %152 = vmatprep.subr.mxu0 0.0
  %153 = vmatpush1.msra.mxu0 0.0
  %154 = vmatprep.subr.mxu0 0.0
  %155 = vmatpush1.msra.mxu0 0.0
  %156 = vmatprep.subr.mxu0 0.0
  %157 = vmatpush1.msra.mxu0 0.0
  %158 = vmatprep.subr.mxu0 0.0
  %159 = vmatpush1.msra.mxu0 0.0
  %160 = vmatprep.subr.mxu0 0.0
  %161 = vmatpush1.msra.mxu0 0.0
  %162 = vmatprep.subr.mxu0 0.0
  %163 = vmatpush1.msra.mxu0 0.0
  %164 = vmatprep.subr.mxu0 0.0
  %165 = vmatpush1.msra.mxu0 0.0
  %166 = vmatprep.subr.mxu0 0.0
  %167 = vmatpush1.msra.mxu0 0.0
  %168 = vmatprep.subr.mxu0 0.0
  %169 = vmatpush1.msra.mxu0 0.0
  %170 = vmatprep.subr.mxu0 0.0
  %171 = vmatpush1.msra.mxu0 0.0
  %172 = vmatprep.subr.mxu0 0.0
  %173 = vmatpush1.msra.mxu0 0.0
  %174 = vmatprep.subr.mxu0 0.0
  %175 = vmatpush1.msra.mxu0 0.0
  %176 = vmatprep.subr.mxu0 0.0
  %177 = vmatpush1.msra.mxu0 0.0
  %178 = vmatprep.subr.mxu0 0.0
  %179 = vmatpush1.msra.mxu0 0.0
  %180 = vmatprep.subr.mxu0 0.0
  %181 = vmatpush1.msra.mxu0 0.0
  %182 = vmatprep.subr.mxu0 0.0
  %183 = vmatpush1.msra.mxu0 0.0
  %184 = vmatprep.subr.mxu0 0.0
  %185 = vmatpush1.msra.mxu0 0.0
  %186 = vmatprep.subr.mxu0 0.0
  %187 = vmatpush1.msra.mxu0 0.0
  %188 = vmatprep.subr.mxu0 0.0
  %189 = vmatpush1.msra.mxu0 0.0
  %190 = vmatprep.subr.mxu0 0.0
  %191 = vmatpush1.msra.mxu0 0.0
  %192 = vmatprep.subr.mxu0 0.0
  %193 = vmatpush1.msra.mxu0 0.0
  %194 = vmatprep.subr.mxu0 0.0
  %195 = vmatpush1.msra.mxu0 0.0
  %196 = vmatprep.subr.mxu0 0.0
  %197 = vmatpush1.msra.mxu0 0.0
  %198 = vmatprep.subr.mxu0 0.0
  %199 = vmatpush1.msra.mxu0 0.0
  %200 = vmatprep.subr.mxu0 0.0
  %201 = vmatpush1.msra.mxu0 0.0
  %202 = vmatprep.subr.mxu0 0.0
  %203 = vmatpush1.msra.mxu0 0.0
  %204 = vmatprep.subr.mxu0 0.0
  %205 = vmatpush1.msra.mxu0 0.0
  %206 = vmatprep.mubr.f32.mxu0 0.0
  %207 = vmatmul.mubr.f32.gmra.mrb[0].mxu0 %v60
  %v208 = vpop.f32.mrb[0].mxu0
  %v209 = vadd.f32 0.0, %v208
  %v210 = vpop.f32.mrb[0].mxu0
  %v211 = vadd.f32 0.0, %v210
  %212 = vdwg.mxu0
  %v213 = vpack.c.bf16 %v138, %v138
  %v214 = vpack.c.bf16 %v140, %v140
  %v247 = vunpack.c.l.b16 %v21
  %v248 = vunpack.c.h.b16 %v21
  %v249 = vunpack.c.l.b16 %v22
  %v250 = vunpack.c.h.b16 %v22
  %v251 = vunpack.c.l.b16 %v23
  %v252 = vunpack.c.h.b16 %v23
  %v253 = vunpack.c.l.b16 %v24
  %v254 = vunpack.c.h.b16 %v24
  %v255 = vunpack.c.l.b16 %v25
  %v256 = vunpack.c.h.b16 %v25
  %v257 = vunpack.c.l.b16 %v26
  %v258 = vunpack.c.h.b16 %v26
  %v259 = vunpack.c.l.b16 %v27
  %v260 = vunpack.c.h.b16 %v27
  %v261 = vunpack.c.l.b16 %v28
  %v262 = vunpack.c.h.b16 %v28
  %v263 = vunpack.c.l.b16 %v29
  %v264 = vunpack.c.h.b16 %v29
  %v265 = vunpack.c.l.b16 %v30
  %v266 = vunpack.c.h.b16 %v30
  %v267 = vunpack.c.l.b16 %v31
  %v268 = vunpack.c.h.b16 %v31
  %v269 = vunpack.c.l.b16 %v32
  %v270 = vunpack.c.h.b16 %v32
  %v271 = vunpack.c.l.b16 %v33
  %v272 = vunpack.c.h.b16 %v33
  %v273 = vunpack.c.l.b16 %v34
  %v274 = vunpack.c.h.b16 %v34
  %v275 = vunpack.c.l.b16 %v35
  %v276 = vunpack.c.h.b16 %v35
  %v277 = vunpack.c.l.b16 %v36
  %v278 = vunpack.c.h.b16 %v36
  %v279 = vunpack.c.l.b16 %v37
  %v280 = vunpack.c.h.b16 %v37
  %v281 = vunpack.c.l.b16 %v38
  %v282 = vunpack.c.h.b16 %v38
  %v283 = vunpack.c.l.b16 %v39
  %v284 = vunpack.c.h.b16 %v39
  %v285 = vunpack.c.l.b16 %v40
  %v286 = vunpack.c.h.b16 %v40
  %v287 = vunpack.c.l.b16 %v41
  %v288 = vunpack.c.h.b16 %v41
  %v289 = vunpack.c.l.b16 %v42
  %v290 = vunpack.c.h.b16 %v42
  %v291 = vunpack.c.l.b16 %v43
  %v292 = vunpack.c.h.b16 %v43
  %v293 = vunpack.c.l.b16 %v44
  %v294 = vunpack.c.h.b16 %v44
  %v295 = vunpack.c.l.b16 %v45
  %v296 = vunpack.c.h.b16 %v45
  %v297 = vunpack.c.l.b16 %v46
  %v298 = vunpack.c.h.b16 %v46
  %v299 = vunpack.c.l.b16 %v47
  %v300 = vunpack.c.h.b16 %v47
  %v301 = vunpack.c.l.b16 %v48
  %v302 = vunpack.c.h.b16 %v48
  %v303 = vunpack.c.l.b16 %v49
  %v304 = vunpack.c.h.b16 %v49
  %v305 = vunpack.c.l.b16 %v50
  %v306 = vunpack.c.h.b16 %v50
  %v307 = vunpack.c.l.b16 %v51
  %v308 = vunpack.c.h.b16 %v51
  %v309 = vunpack.c.l.b16 %v52
  %v310 = vunpack.c.h.b16 %v52
  %v311 = vpack.c.b16 %v249, %v247
  %v312 = vpack.c.b16 %v250, %v248
  %v313 = vpack.c.b16 %v253, %v251
  %v314 = vpack.c.b16 %v254, %v252
  %v315 = vpack.c.b16 %v257, %v255
  %v316 = vpack.c.b16 %v258, %v256
  %v317 = vpack.c.b16 %v261, %v259
  %v318 = vpack.c.b16 %v262, %v260
  %v319 = vpack.c.b16 %v265, %v263
  %v320 = vpack.c.b16 %v266, %v264
  %v321 = vpack.c.b16 %v269, %v267
  %v322 = vpack.c.b16 %v270, %v268
  %v323 = vpack.c.b16 %v273, %v271
  %v324 = vpack.c.b16 %v274, %v272
  %v325 = vpack.c.b16 %v277, %v275
  %v326 = vpack.c.b16 %v278, %v276
  %v327 = vpack.c.b16 %v281, %v279
  %v328 = vpack.c.b16 %v282, %v280
  %v329 = vpack.c.b16 %v285, %v283
  %v330 = vpack.c.b16 %v286, %v284
  %v331 = vpack.c.b16 %v289, %v287
  %v332 = vpack.c.b16 %v290, %v288
  %v333 = vpack.c.b16 %v293, %v291
  %v334 = vpack.c.b16 %v294, %v292
  %v335 = vpack.c.b16 %v297, %v295
  %v336 = vpack.c.b16 %v298, %v296
  %v337 = vpack.c.b16 %v301, %v299
  %v338 = vpack.c.b16 %v302, %v300
  %v339 = vpack.c.b16 %v305, %v303
  %v340 = vpack.c.b16 %v306, %v304
  %v341 = vpack.c.b16 %v309, %v307
  %v342 = vpack.c.b16 %v310, %v308
  %375 = vmatprep.subr.bf16.mxu0 %v312
  %376 = vmatpush1.bf16.msra.mxu0 %v311
  %377 = vmatprep.subr.bf16.mxu0 %v314
  %378 = vmatpush1.bf16.msra.mxu0 %v313
  %379 = vmatprep.subr.bf16.mxu0 %v316
  %380 = vmatpush1.bf16.msra.mxu0 %v315
  %381 = vmatprep.subr.bf16.mxu0 %v318
  %382 = vmatpush1.bf16.msra.mxu0 %v317
  %383 = vmatprep.subr.bf16.mxu0 %v320
  %384 = vmatpush1.bf16.msra.mxu0 %v319
  %385 = vmatprep.subr.bf16.mxu0 %v322
  %386 = vmatpush1.bf16.msra.mxu0 %v321
  %387 = vmatprep.subr.bf16.mxu0 %v324
  %388 = vmatpush1.bf16.msra.mxu0 %v323
  %389 = vmatprep.subr.bf16.mxu0 %v326
  %390 = vmatpush1.bf16.msra.mxu0 %v325
  %391 = vmatprep.subr.bf16.mxu0 %v328
  %392 = vmatpush1.bf16.msra.mxu0 %v327
  %393 = vmatprep.subr.bf16.mxu0 %v330
  %394 = vmatpush1.bf16.msra.mxu0 %v329
  %395 = vmatprep.subr.bf16.mxu0 %v332
  %396 = vmatpush1.bf16.msra.mxu0 %v331
  %397 = vmatprep.subr.bf16.mxu0 %v334
  %398 = vmatpush1.bf16.msra.mxu0 %v333
  %399 = vmatprep.subr.bf16.mxu0 %v336
  %400 = vmatpush1.bf16.msra.mxu0 %v335
  %401 = vmatprep.subr.bf16.mxu0 %v338
  %402 = vmatpush1.bf16.msra.mxu0 %v337
  %403 = vmatprep.subr.bf16.mxu0 %v340
  %404 = vmatpush1.bf16.msra.mxu0 %v339
  %405 = vmatprep.subr.bf16.mxu0 %v342
  %406 = vmatpush1.bf16.msra.mxu0 %v341
  %407 = vmatprep.mubr.bf16.mxu0 %v214
  %408 = vmatmul.mubr.bf16.gmra.mrb[0].mxu0 %v213
  %v409 = vpop.f32.mrb[0].mxu0
  %v410 = vadd.f32 0.0, %v409
  %v411 = vpop.f32.mrb[0].mxu0
  %v412 = vadd.f32 0.0, %v411
  %v413 = vpop.f32.mrb[0].mxu0
  %v414 = vpop.f32.mrb[0].mxu0
  %415 = vdwg.mxu0
  %v416 = vpack.c.bf16 %v209, %v209
  %v417 = vpack.c.bf16 %v211, %v211
  %418 = vmatprep.subr.bf16.mxu0 %v312
  %419 = vmatpush1.bf16.msra.mxu0 %v311
  %420 = vmatprep.subr.bf16.mxu0 %v314
  %421 = vmatpush1.bf16.msra.mxu0 %v313
  %422 = vmatprep.subr.bf16.mxu0 %v316
  %423 = vmatpush1.bf16.msra.mxu0 %v315
  %424 = vmatprep.subr.bf16.mxu0 %v318
  %425 = vmatpush1.bf16.msra.mxu0 %v317
  %426 = vmatprep.subr.bf16.mxu0 %v320
  %427 = vmatpush1.bf16.msra.mxu0 %v319
  %428 = vmatprep.subr.bf16.mxu0 %v322
  %429 = vmatpush1.bf16.msra.mxu0 %v321
  %430 = vmatprep.subr.bf16.mxu0 %v324
  %431 = vmatpush1.bf16.msra.mxu0 %v323
  %432 = vmatprep.subr.bf16.mxu0 %v326
  %433 = vmatpush1.bf16.msra.mxu0 %v325
  %434 = vmatprep.subr.bf16.mxu0 %v328
  %435 = vmatpush1.bf16.msra.mxu0 %v327
  %436 = vmatprep.subr.bf16.mxu0 %v330
  %437 = vmatpush1.bf16.msra.mxu0 %v329
  %438 = vmatprep.subr.bf16.mxu0 %v332
  %439 = vmatpush1.bf16.msra.mxu0 %v331
  %440 = vmatprep.subr.bf16.mxu0 %v334
  %441 = vmatpush1.bf16.msra.mxu0 %v333
  %442 = vmatprep.subr.bf16.mxu0 %v336
  %443 = vmatpush1.bf16.msra.mxu0 %v335
  %444 = vmatprep.subr.bf16.mxu0 %v338
  %445 = vmatpush1.bf16.msra.mxu0 %v337
  %446 = vmatprep.subr.bf16.mxu0 %v340
  %447 = vmatpush1.bf16.msra.mxu0 %v339
  %448 = vmatprep.subr.bf16.mxu0 %v342
  %449 = vmatpush1.bf16.msra.mxu0 %v341
  %450 = vmatprep.mubr.bf16.mxu0 %v417
  %451 = vmatmul.mubr.bf16.gmra.mrb[0].mxu0 %v416
  %v452 = vpop.f32.mrb[0].mxu0
  %v453 = vadd.f32 0.0, %v452
  %v454 = vpop.f32.mrb[0].mxu0
  %v455 = vadd.f32 0.0, %v454
  %v456 = vpop.f32.mrb[0].mxu0
  %v457 = vpop.f32.mrb[0].mxu0
  %458 = vdwg.mxu0
  %v459 = vlaneseq
  %v460 = vand.u32 %v459, 127
  %v461 = vadd.s32 %v460, 128
  %v462 = vadd.s32 %v460, 256
  %v463 = vadd.s32 %v460, 384
  %vm464 = vcmp.eq.s32.totalorder %v460, 0
  %vm465 = vcmp.eq.s32.totalorder %v461, 0
  %vm466 = vcmp.eq.s32.totalorder %v462, 0
  %vm467 = vcmp.eq.s32.totalorder %v463, 0
  %vm468 = vcmp.eq.s32.totalorder %v460, 256
  %vm469 = vcmp.eq.s32.totalorder %v461, 256
  %vm470 = vcmp.eq.s32.totalorder %v462, 256
  %vm471 = vcmp.eq.s32.totalorder %v463, 256
  %vm472 = vmor %vm464, %vm468
  %vm473 = vmor %vm465, %vm469
  %vm474 = vmor %vm466, %vm470
  %vm475 = vmor %vm467, %vm471
  %v476 = vsel %vm59, %v19, 0
  %478 = vmatprep.subr.mxu0 %v65
  %479 = vmatpush1.msra.mxu0 %v63
  %480 = vmatprep.subr.mxu0 0.0
  %481 = vmatpush1.msra.mxu0 0.0
  %482 = vmatprep.subr.mxu0 0.0
  %483 = vmatpush1.msra.mxu0 0.0
  %484 = vmatprep.subr.mxu0 0.0
  %485 = vmatpush1.msra.mxu0 0.0
  %486 = vmatprep.subr.mxu0 0.0
  %487 = vmatpush1.msra.mxu0 0.0
  %488 = vmatprep.subr.mxu0 0.0
  %489 = vmatpush1.msra.mxu0 0.0
  %490 = vmatprep.subr.mxu0 0.0
  %491 = vmatpush1.msra.mxu0 0.0
  %492 = vmatprep.subr.mxu0 0.0
  %493 = vmatpush1.msra.mxu0 0.0
  %494 = vmatprep.subr.mxu0 0.0
  %495 = vmatpush1.msra.mxu0 0.0
  %496 = vmatprep.subr.mxu0 0.0
  %497 = vmatpush1.msra.mxu0 0.0
  %498 = vmatprep.subr.mxu0 0.0
  %499 = vmatpush1.msra.mxu0 0.0
  %500 = vmatprep.subr.mxu0 0.0
  %501 = vmatpush1.msra.mxu0 0.0
  %502 = vmatprep.subr.mxu0 0.0
  %503 = vmatpush1.msra.mxu0 0.0
  %504 = vmatprep.subr.mxu0 0.0
  %505 = vmatpush1.msra.mxu0 0.0
  %506 = vmatprep.subr.mxu0 0.0
  %507 = vmatpush1.msra.mxu0 0.0
  %508 = vmatprep.subr.mxu0 0.0
  %509 = vmatpush1.msra.mxu0 0.0
  %510 = vmatprep.subr.mxu0 0.0
  %511 = vmatpush1.msra.mxu0 0.0
  %512 = vmatprep.subr.mxu0 0.0
  %513 = vmatpush1.msra.mxu0 0.0
  %514 = vmatprep.subr.mxu0 0.0
  %515 = vmatpush1.msra.mxu0 0.0
  %516 = vmatprep.subr.mxu0 0.0
  %517 = vmatpush1.msra.mxu0 0.0
  %518 = vmatprep.subr.mxu0 0.0
  %519 = vmatpush1.msra.mxu0 0.0
  %520 = vmatprep.subr.mxu0 0.0
  %521 = vmatpush1.msra.mxu0 0.0
  %522 = vmatprep.subr.mxu0 0.0
  %523 = vmatpush1.msra.mxu0 0.0
  %524 = vmatprep.subr.mxu0 0.0
  %525 = vmatpush1.msra.mxu0 0.0
  %526 = vmatprep.subr.mxu0 0.0
  %527 = vmatpush1.msra.mxu0 0.0
  %528 = vmatprep.subr.mxu0 0.0
  %529 = vmatpush1.msra.mxu0 0.0
  %530 = vmatprep.subr.mxu0 0.0
  %531 = vmatpush1.msra.mxu0 0.0
  %532 = vmatprep.subr.mxu0 0.0
  %533 = vmatpush1.msra.mxu0 0.0
  %534 = vmatprep.subr.mxu0 0.0
  %535 = vmatpush1.msra.mxu0 0.0
  %536 = vmatprep.subr.mxu0 0.0
  %537 = vmatpush1.msra.mxu0 0.0
  %538 = vmatprep.subr.mxu0 0.0
  %539 = vmatpush1.msra.mxu0 0.0
  %540 = vmatprep.subr.mxu0 0.0
  %541 = vmatpush1.msra.mxu0 0.0
  %542 = vmatprep.mubr.f32.mxu0 0.0
  %543 = vmatmul.mubr.f32.gmra.mrb[0].mxu0 %v476
  %v544 = vpop.f32.mrb[0].mxu0
  %v545 = vadd.f32 %v410, %v544
  %v546 = vpop.f32.mrb[0].mxu0
  %v547 = vadd.f32 %v412, %v546
  %548 = vdwg.mxu0
  %549 = vmatprep.subr.mxu0 %v69
  %550 = vmatpush1.msra.mxu0 %v67
  %551 = vmatprep.subr.mxu0 0.0
  %552 = vmatpush1.msra.mxu0 0.0
  %553 = vmatprep.subr.mxu0 0.0
  %554 = vmatpush1.msra.mxu0 0.0
  %555 = vmatprep.subr.mxu0 0.0
  %556 = vmatpush1.msra.mxu0 0.0
  %557 = vmatprep.subr.mxu0 0.0
  %558 = vmatpush1.msra.mxu0 0.0
  %559 = vmatprep.subr.mxu0 0.0
  %560 = vmatpush1.msra.mxu0 0.0
  %561 = vmatprep.subr.mxu0 0.0
  %562 = vmatpush1.msra.mxu0 0.0
  %563 = vmatprep.subr.mxu0 0.0
  %564 = vmatpush1.msra.mxu0 0.0
  %565 = vmatprep.subr.mxu0 0.0
  %566 = vmatpush1.msra.mxu0 0.0
  %567 = vmatprep.subr.mxu0 0.0
  %568 = vmatpush1.msra.mxu0 0.0
  %569 = vmatprep.subr.mxu0 0.0
  %570 = vmatpush1.msra.mxu0 0.0
  %571 = vmatprep.subr.mxu0 0.0
  %572 = vmatpush1.msra.mxu0 0.0
  %573 = vmatprep.subr.mxu0 0.0
  %574 = vmatpush1.msra.mxu0 0.0
  %575 = vmatprep.subr.mxu0 0.0
  %576 = vmatpush1.msra.mxu0 0.0
  %577 = vmatprep.subr.mxu0 0.0
  %578 = vmatpush1.msra.mxu0 0.0
  %579 = vmatprep.subr.mxu0 0.0
  %580 = vmatpush1.msra.mxu0 0.0
  %581 = vmatprep.subr.mxu0 0.0
  %582 = vmatpush1.msra.mxu0 0.0
  %583 = vmatprep.subr.mxu0 0.0
  %584 = vmatpush1.msra.mxu0 0.0
  %585 = vmatprep.subr.mxu0 0.0
  %586 = vmatpush1.msra.mxu0 0.0
  %587 = vmatprep.subr.mxu0 0.0
  %588 = vmatpush1.msra.mxu0 0.0
  %589 = vmatprep.subr.mxu0 0.0
  %590 = vmatpush1.msra.mxu0 0.0
  %591 = vmatprep.subr.mxu0 0.0
  %592 = vmatpush1.msra.mxu0 0.0
  %593 = vmatprep.subr.mxu0 0.0
  %594 = vmatpush1.msra.mxu0 0.0
  %595 = vmatprep.subr.mxu0 0.0
  %596 = vmatpush1.msra.mxu0 0.0
  %597 = vmatprep.subr.mxu0 0.0
  %598 = vmatpush1.msra.mxu0 0.0
  %599 = vmatprep.subr.mxu0 0.0
  %600 = vmatpush1.msra.mxu0 0.0
  %601 = vmatprep.subr.mxu0 0.0
  %602 = vmatpush1.msra.mxu0 0.0
  %603 = vmatprep.subr.mxu0 0.0
  %604 = vmatpush1.msra.mxu0 0.0
  %605 = vmatprep.subr.mxu0 0.0
  %606 = vmatpush1.msra.mxu0 0.0
  %607 = vmatprep.subr.mxu0 0.0
  %608 = vmatpush1.msra.mxu0 0.0
  %609 = vmatprep.subr.mxu0 0.0
  %610 = vmatpush1.msra.mxu0 0.0
  %611 = vmatprep.subr.mxu0 0.0
  %612 = vmatpush1.msra.mxu0 0.0
  %613 = vmatprep.mubr.f32.mxu0 0.0
  %614 = vmatmul.mubr.f32.gmra.mrb[0].mxu0 %v476
  %v615 = vpop.f32.mrb[0].mxu0
  %v616 = vadd.f32 %v453, %v615
  %v617 = vpop.f32.mrb[0].mxu0
  %v618 = vadd.f32 %v455, %v617
  %619 = vdwg.mxu0
  %621 = vset.pattern.permute.xlu0 0
  %622 = vperm.xlu0 %621, %v20
  %v623 = vpop.permute.xlu0 %622
  %v625 = vadd.f32 %v545, %v623
  %v626 = vadd.f32 %v547, %v623
  %v627 = vadd.f32 %v616, %v623
  %v628 = vadd.f32 %v618, %v623
  %v629 = vsel %vm472, 1, 0
  %v630 = vsel %vm473, 1, 0
  %v631 = vsel %vm474, 1, 0
  %v632 = vsel %vm475, 1, 0
  %v633 = vcvt.s32.f32 %v629
  %v634 = vcvt.s32.f32 %v630
  %v635 = vcvt.s32.f32 %v631
  %v636 = vcvt.s32.f32 %v632
  %637 = vset.pattern.permute.xlu0 1
  %638 = vperm.xlu0 %637, %v20
  %v639 = vpop.permute.xlu0 %638
  %v641 = vmul.f32 %v639, %v633
  %v642 = vmul.f32 %v639, %v634
  %v643 = vmul.f32 %v639, %v635
  %v644 = vmul.f32 %v639, %v636
  %v645 = vadd.f32 %v625, %v641
  %v646 = vadd.f32 %v626, %v642
  %v647 = vadd.f32 %v627, %v643
  %v648 = vadd.f32 %v628, %v644
  %v649 = vsel %vm62, %v645, 0.0
  %v650 = vsel %vm62, %v646, 0.0
  %v651 = vadd.f32 %v649, %v650
  %v652 = vsel %vm62, %v647, 0.0
  %v653 = vadd.f32 %v651, %v652
  %v654 = vsel %vm62, %v648, 0.0
  %v655 = vadd.f32 %v653, %v654
  %656 = vadd.xlane.f32.xlu0 %v655
  %v657 = vpop.xlane.xlu0 %656
  %v658 = vmul.f32 %v657, 0.001953125
  %v659 = vsub.f32 %v645, %v658
  %v660 = vsub.f32 %v646, %v658
  %v661 = vsub.f32 %v647, %v658
  %v662 = vsub.f32 %v648, %v658
  %v663 = vmul.f32 %v659, %v659
  %v664 = vmul.f32 %v660, %v660
  %v665 = vmul.f32 %v661, %v661
  %v666 = vmul.f32 %v662, %v662
  %v667 = vsel %vm62, %v663, 0.0
  %v668 = vsel %vm62, %v664, 0.0
  %v669 = vadd.f32 %v667, %v668
  %v670 = vsel %vm62, %v665, 0.0
  %v671 = vadd.f32 %v669, %v670
  %v672 = vsel %vm62, %v666, 0.0
  %v673 = vadd.f32 %v671, %v672
  %674 = vadd.xlane.f32.xlu0 %v673
  %v675 = vpop.xlane.xlu0 %674
  %v676 = vmul.f32 %v675, 0.001953125
  %v677 = vadd.f32 %v676, 1e-05
  %v678 = vrsqrt.pop %v677
  %v679 = vmul.f32 %v678, %v20
  %681 = vset.pattern.permute.xlu0 2
  %682 = vperm.xlu0 %681, %v679
  %v683 = vpop.permute.xlu0 %682
  %v685 = vmul.f32 %v659, %v683
  %v686 = vmul.f32 %v660, %v683
  %v687 = vmul.f32 %v661, %v683
  %v688 = vmul.f32 %v662, %v683
  %689 = vset.pattern.permute.xlu0 3
  %690 = vperm.xlu0 %689, %v20
  %v691 = vpop.permute.xlu0 %690
  %v693 = vadd.f32 %v685, %v691
  %v694 = vadd.f32 %v686, %v691
  %v695 = vadd.f32 %v687, %v691
  %v696 = vadd.f32 %v688, %v691
  %v699 = vadd.f32 %v693, %v17
  %v700 = vadd.f32 %v694, %v57
  %v701 = vadd.f32 %v695, %v18
  %v702 = vadd.f32 %v696, %v58
  %v703 = vmul.f32 %v699, 0.5
  %v704 = vmul.f32 %v700, 0.5
  %v705 = vmul.f32 %v701, 0.5
  %v706 = vmul.f32 %v702, 0.5
  %v707 = vmul.f32 %v699, 0.70710677
  %v708 = vmul.f32 %v700, 0.70710677
  %v709 = vmul.f32 %v701, 0.70710677
  %v710 = vmul.f32 %v702, 0.70710677
  %vm711 = vcmp.ge.f32.partialorder %v707, 0.0
  %vm712 = vcmp.ge.f32.partialorder %v708, 0.0
  %vm713 = vcmp.ge.f32.partialorder %v709, 0.0
  %vm714 = vcmp.ge.f32.partialorder %v710, 0.0
  %v715 = vsel %vm711, 1.0, -1.0
  %v716 = vsel %vm712, 1.0, -1.0
  %v717 = vsel %vm713, 1.0, -1.0
  %v718 = vsel %vm714, 1.0, -1.0
  %v719 = vand.u32 2147483647, %v707
  %v720 = vand.u32 2147483647, %v708
  %v721 = vand.u32 2147483647, %v709
  %v722 = vand.u32 2147483647, %v710
  %v723 = vmul.f32 %v719, 0.3275911
  %v724 = vmul.f32 %v720, 0.3275911
  %v725 = vmul.f32 %v721, 0.3275911
  %v726 = vmul.f32 %v722, 0.3275911
  %v727 = vadd.f32 %v723, 1.0
  %v728 = vadd.f32 %v724, 1.0
  %v729 = vadd.f32 %v725, 1.0
  %v730 = vadd.f32 %v726, 1.0
  %v731 = vrcp.pop %v727
  %v732 = vrcp.pop %v728
  %v733 = vrcp.pop %v729
  %v734 = vrcp.pop %v730
  %v735 = vmul.f32 %v731, 1.0614054
  %v736 = vmul.f32 %v732, 1.0614054
  %v737 = vmul.f32 %v733, 1.0614054
  %v738 = vmul.f32 %v734, 1.0614054
  %v739 = vadd.f32 %v735, -1.4531521
  %v740 = vadd.f32 %v736, -1.4531521
  %v741 = vadd.f32 %v737, -1.4531521
  %v742 = vadd.f32 %v738, -1.4531521
  %v743 = vmul.f32 %v731, %v739
  %v744 = vmul.f32 %v732, %v740
  %v745 = vmul.f32 %v733, %v741
  %v746 = vmul.f32 %v734, %v742
  %v747 = vadd.f32 %v743, 1.4214138
  %v748 = vadd.f32 %v744, 1.4214138
  %v749 = vadd.f32 %v745, 1.4214138
  %v750 = vadd.f32 %v746, 1.4214138
  %v751 = vmul.f32 %v731, %v747
  %v752 = vmul.f32 %v732, %v748
  %v753 = vmul.f32 %v733, %v749
  %v754 = vmul.f32 %v734, %v750
  %v755 = vadd.f32 %v751, -0.28449672
  %v756 = vadd.f32 %v752, -0.28449672
  %v757 = vadd.f32 %v753, -0.28449672
  %v758 = vadd.f32 %v754, -0.28449672
  %v759 = vmul.f32 %v731, %v755
  %v760 = vmul.f32 %v732, %v756
  %v761 = vmul.f32 %v733, %v757
  %v762 = vmul.f32 %v734, %v758
  %v763 = vadd.f32 %v759, 0.2548296
  %v764 = vadd.f32 %v760, 0.2548296
  %v765 = vadd.f32 %v761, 0.2548296
  %v766 = vadd.f32 %v762, 0.2548296
  %v767 = vmul.f32 %v731, %v763
  %v768 = vmul.f32 %v732, %v764
  %v769 = vmul.f32 %v733, %v765
  %v770 = vmul.f32 %v734, %v766
  %v771 = vsub.f32 0.0, %v719
  %v772 = vsub.f32 0.0, %v720
  %v773 = vsub.f32 0.0, %v721
  %v774 = vsub.f32 0.0, %v722
  %v775 = vmul.f32 %v771, %v719
  %v776 = vmul.f32 %v772, %v720
  %v777 = vmul.f32 %v773, %v721
  %v778 = vmul.f32 %v774, %v722
  %v779 = vmul.f32 %v775, 1.442695
  %v780 = vpow.pop %v779
  %v781 = vmul.f32 %v776, 1.442695
  %v782 = vpow.pop %v781
  %v783 = vmul.f32 %v777, 1.442695
  %v784 = vpow.pop %v783
  %v785 = vmul.f32 %v778, 1.442695
  %v786 = vpow.pop %v785
  %v787 = vmul.f32 %v767, %v780
  %v788 = vmul.f32 %v768, %v782
  %v789 = vmul.f32 %v769, %v784
  %v790 = vmul.f32 %v770, %v786
  %v791 = vsub.f32 1.0, %v787
  %v792 = vsub.f32 1.0, %v788
  %v793 = vsub.f32 1.0, %v789
  %v794 = vsub.f32 1.0, %v790
  %v795 = vmul.f32 %v715, %v791
  %v796 = vmul.f32 %v716, %v792
  %v797 = vmul.f32 %v717, %v793
  %v798 = vmul.f32 %v718, %v794
  %v799 = vadd.f32 %v795, 1.0
  %v800 = vadd.f32 %v796, 1.0
  %v801 = vadd.f32 %v797, 1.0
  %v802 = vadd.f32 %v798, 1.0
  %v803 = vmul.f32 %v703, %v799
  %v804 = vmul.f32 %v704, %v800
  %v805 = vmul.f32 %v705, %v801
  %v806 = vmul.f32 %v706, %v802
  %v811 = vcombine.low %v803, %v804
  %v812 = vcombine.low %v805, %v806
  %815 = vst [vmem:[%s4] sm:$0xff] %v811
  %816 = vst [vmem:[%s4 + $0x8] sm:$0xff] %v812
  // Predicated region
  $region18: #{_feb_forward_impl.1} parent=0 // pred_check
    _
  $region19: #{_feb_forward_impl.1} parent=0 // pred_check_branch
    %818 = sbr.rel (0) target = $region21
  $region20: #{_feb_forward_impl.1} parent=0 // pred_region
    _
  $region21: #{_feb_forward_impl.1} parent=0 // pred_fallthru
    _
  // Predicated region
  $region22: #{_feb_forward_impl.1} parent=0 // pred_check
    _
  $region23: #{_feb_forward_impl.1} parent=0 // pred_check_branch
    %820 = sbr.rel (0) target = $region25
  $region24: #{_feb_forward_impl.1} parent=0 // pred_region
    _
  $region25: #{_feb_forward_impl.1} parent=0 // pred_fallthru
    _

</llo_original>
